<compile_context>
chip_gen: v6e
topology: v6e:2x2x1
jax: 0.10.0
libtpu: 0.0.40
codegen_flags: <defaults>
</compile_context>

<pallas_src>
import functools

import jax
import jax.numpy as jnp
from jax.experimental import pallas as pl
from jax.experimental.pallas import tpu as pltpu


def _down_kernel(x_ref, w1_ref, w2_ref, b1_ref, b2_ref, o_ref, *, hp):
    """Whole `Down` block for one batch block (n_lane images packed along lanes).

    x_ref  : (1, 2, 2, hp, L1)  pooling-parity slabs; L1 = n_lane*wp*cin
    w1_ref : (3, L1, M1)        per-kh banded conv1 weights (BN1 scale folded in)
    w2_ref : (3, M1, M2)        per-kh banded conv2 weights (BN2 scale folded in)
    b1_ref : (1, M1)            BN1 bias tiled along (image, W) lanes (f32)
    b2_ref : (1, M2)            BN2 bias tiled along (image, W) lanes (f32)
    o_ref  : (1, hp, M2)        output rows; M2 = n_lane*wp*cout (lane-dense)
    """
    cdt = w1_ref.dtype  # MXU operand dtype (bf16 or f32); accumulation is always f32

    # ---- MaxPool2d(2): four pre-split contiguous parity slabs -> elementwise max (pure VPU) ----
    rows = jnp.maximum(
        jnp.maximum(x_ref[0, 0, 0], x_ref[0, 0, 1]),
        jnp.maximum(x_ref[0, 1, 0], x_ref[0, 1, 1]),
    )  # (hp, L1)

    def conv_bn_relu(r, w_ref, b_ref):
        # 3x3 SAME conv as 3 accumulated MXU matmuls over H-shifted row views.
        # W taps + W padding are folded into the banded per-tap weights; the H halo is a
        # single zero row shared by all images (images are packed along lanes, not rows).
        l = r.shape[-1]
        zr = jnp.zeros((1, l), cdt)
        rp = jnp.concatenate([zr, r, zr], axis=0)                       # (hp + 2, L)
        acc = jnp.dot(rp[0:hp], w_ref[0], preferred_element_type=jnp.float32)
        acc = acc + jnp.dot(rp[1:hp + 1], w_ref[1], preferred_element_type=jnp.float32)
        acc = acc + jnp.dot(rp[2:hp + 2], w_ref[2], preferred_element_type=jnp.float32)
        return jnp.maximum(acc + b_ref[...], 0.0)                       # f32 bias + ReLU epilogue

    h = conv_bn_relu(rows, w1_ref, b1_ref)                              # (hp, M1) f32
    o = conv_bn_relu(h.astype(cdt), w2_ref, b2_ref)                     # (hp, M2) f32
    o_ref[0] = o.astype(o_ref.dtype)                                    # lane-dense full-width store


def _banded_tap_weights(w_hwio, wp, n_lane):
    """Fold the kW taps + W padding + lane-packed images into per-kh matmul weights.

    w_hwio : (3, 3, Ci, Co) conv weight (BN scale already folded in), HWIO.
    Returns (3, n_lane*wp*Ci, n_lane*wp*Co): for each kh tap a dense weight such that, with an
    activation row laid out as [img0 | img1 | ...] (each img block = wp*Ci lanes), one matmul
    produces the SAME-padded conv contribution of that kh tap for all images.  Entries outside
    the +/-1 W band (and across images) are zero, so no padded activation buffer is needed.
    """
    kh, kw, ci, co = w_hwio.shape
    xi = jnp.arange(wp)[:, None]
    xo = jnp.arange(wp)[None, :]
    dx = xi - xo + kw // 2                                   # kW tap index for (xi, xo)
    valid = (dx >= 0) & (dx < kw)
    wg = w_hwio[:, jnp.clip(dx, 0, kw - 1)]                  # (kh, wp_in, wp_out, ci, co)
    wg = jnp.where(valid[None, :, :, None, None], wg, 0.0)
    wg = jnp.transpose(wg, (0, 1, 3, 2, 4)).reshape(kh, wp * ci, wp * co)
    eye = jnp.eye(n_lane, dtype=wg.dtype)                    # block-diagonal over lane-packed imgs
    big = jnp.einsum('ab,kij->kaibj', eye, wg)
    return big.reshape(kh, n_lane * wp * ci, n_lane * wp * co)


def down_forward(x_nchw, w1, g1, be1, rm1, rv1, w2, g2, be2, rm2, rv2,
                 eps=1e-5, compute_dtype=jnp.bfloat16):
    """`Down` forward: MaxPool2d(2) then DoubleConv (eval-mode BatchNorm).

    x_nchw: (N, Cin, H, W); w1: (Cmid, Cin, 3, 3); w2: (Cout, Cmid, 3, 3).
    Returns (N, Cout, H//2, W//2) in f32 (NCHW), matching the PyTorch module.
    """
    n, cin, h, w = x_nchw.shape
    assert h % 2 == 0 and w % 2 == 0, "MaxPool2d(2) path assumes even spatial dims"
    hp, wp = h // 2, w // 2
    cmid, cout = w1.shape[0], w2.shape[0]

    # Lane packing: pack n_lane images side-by-side along lanes so the output slab width
    # (n_lane*wp*cout) reaches a multiple of 128 when possible (lane-dense stores).
    n_lane = max(1, min(n, -(-128 // (wp * cout))))
    while n % n_lane:
        n_lane -= 1
    g = n // n_lane

    L1 = n_lane * wp * cin
    M1 = n_lane * wp * cmid
    M2 = n_lane * wp * cout

    # ---- eval-mode BN folding: scale into conv weights, bias stays for the f32 epilogue ----
    s1 = g1 / jnp.sqrt(rv1 + eps)
    b1 = be1 - rm1 * s1
    s2 = g2 / jnp.sqrt(rv2 + eps)
    b2 = be2 - rm2 * s2
    w1s = jnp.transpose(w1, (2, 3, 1, 0)).astype(jnp.float32) * s1[None, None, None, :]
    w2s = jnp.transpose(w2, (2, 3, 1, 0)).astype(jnp.float32) * s2[None, None, None, :]

    w1b = _banded_tap_weights(w1s, wp, n_lane).astype(compute_dtype)   # (3, L1, M1)
    w2b = _banded_tap_weights(w2s, wp, n_lane).astype(compute_dtype)   # (3, M1, M2)
    b1r = jnp.tile(b1.astype(jnp.float32), n_lane * wp).reshape(1, M1)
    b2r = jnp.tile(b2.astype(jnp.float32), n_lane * wp).reshape(1, M2)

    wbytes = (3 * L1 * M1 + 3 * M1 * M2) * jnp.dtype(compute_dtype).itemsize
    assert wbytes <= 16 * 1024 * 1024, (
        "banded per-tap weights exceed the single-block VMEM budget; tile wp / use im2col")

    # One-time HBM-side layout: NCHW -> (batch-block, H-parity, W-parity, pooled-row, lanes),
    # with lanes = (image-in-block, pooled-col, cin).  No in-kernel relayouts, no jnp.pad.
    x_nhwc = jnp.transpose(x_nchw, (0, 2, 3, 1))                       # (n, h, w, cin)
    x6 = x_nhwc.reshape(g, n_lane, hp, 2, wp, 2, cin)
    x_pack = jnp.transpose(x6, (0, 3, 5, 2, 1, 4, 6)).reshape(g, 2, 2, hp, L1)
    x_pack = x_pack.astype(compute_dtype)

    kernel = functools.partial(_down_kernel, hp=hp)

    out_rows = pl.pallas_call(
        kernel,
        out_shape=jax.ShapeDtypeStruct((g, hp, M2), jnp.float32),
        grid=(g,),
        in_specs=[
            pl.BlockSpec((1, 2, 2, hp, L1), lambda i: (i, 0, 0, 0, 0)),
            # Weights / biases: constant index maps -> resident across grid steps.
            pl.BlockSpec((3, L1, M1), lambda i: (0, 0, 0)),
            pl.BlockSpec((3, M1, M2), lambda i: (0, 0, 0)),
            pl.BlockSpec((1, M1), lambda i: (0, 0)),
            pl.BlockSpec((1, M2), lambda i: (0, 0)),
        ],
        out_specs=pl.BlockSpec((1, hp, M2), lambda i: (i, 0, 0)),
        compiler_params=pltpu.CompilerParams(
            dimension_semantics=("parallel",),
            vmem_limit_bytes=32 * 1024 * 1024,
        ),
    )(x_pack, w1b, w2b, b1r, b2r)

    # (g, hp, n_lane*wp*cout) -> NCHW
    out = out_rows.reshape(g, hp, n_lane, wp, cout)
    out = jnp.transpose(out, (0, 2, 4, 1, 3)).reshape(n, cout, hp, wp)
    return out


def torch_style_reference(x, w1, g1, be1, rm1, rv1, w2, g2, be2, rm2, rv2, eps=1e-5):
    """Pure-JAX reference mirroring the PyTorch `Down` module (eval-mode BN)."""
    n, c, h, w = x.shape
    xp = x.reshape(n, c, h // 2, 2, w // 2, 2).max(axis=(3, 5))        # MaxPool2d(2)
    dn = ('NCHW', 'OIHW', 'NCHW')

    def bn_relu(y, g, be, rm, rv):
        g = g.reshape(1, -1, 1, 1)
        be = be.reshape(1, -1, 1, 1)
        rm = rm.reshape(1, -1, 1, 1)
        rv = rv.reshape(1, -1, 1, 1)
        return jnp.maximum((y - rm) / jnp.sqrt(rv + eps) * g + be, 0.0)

    y = jax.lax.conv_general_dilated(xp, w1, (1, 1), 'SAME', dimension_numbers=dn)
    y = bn_relu(y, g1, be1, rm1, rv1)
    y = jax.lax.conv_general_dilated(y, w2, (1, 1), 'SAME', dimension_numbers=dn)
    return bn_relu(y, g2, be2, rm2, rv2)


if __name__ == "__main__":
    # Module config: Down(in_channels=4, out_channels=8) => MaxPool2d(2) + DoubleConv(4, 8)
    N, Cin, H, W = 2, 4, 16, 16
    Cmid, Cout = 8, 8

    key = jax.random.PRNGKey(0)
    keys = jax.random.split(key, 11)

    x = jax.random.normal(keys[0], (N, Cin, H, W), jnp.float32)

    # Conv weights (PyTorch layout: out, in, kH, kW), bias=False
    w1 = jax.random.normal(keys[1], (Cmid, Cin, 3, 3), jnp.float32) * 0.1
    w2 = jax.random.normal(keys[2], (Cout, Cmid, 3, 3), jnp.float32) * 0.1

    # BatchNorm parameters + running stats (deterministic)
    g1 = 1.0 + 0.1 * jax.random.normal(keys[3], (Cmid,), jnp.float32)
    be1 = 0.1 * jax.random.normal(keys[4], (Cmid,), jnp.float32)
    rm1 = 0.1 * jax.random.normal(keys[5], (Cmid,), jnp.float32)
    rv1 = jax.random.uniform(keys[6], (Cmid,), jnp.float32, 0.5, 1.5)

    g2 = 1.0 + 0.1 * jax.random.normal(keys[7], (Cout,), jnp.float32)
    be2 = 0.1 * jax.random.normal(keys[8], (Cout,), jnp.float32)
    rm2 = 0.1 * jax.random.normal(keys[9], (Cout,), jnp.float32)
    rv2 = jax.random.uniform(keys[10], (Cout,), jnp.float32, 0.5, 1.5)

    params = (w1, g1, be1, rm1, rv1, w2, g2, be2, rm2, rv2)

    ref = jax.block_until_ready(torch_style_reference(x, *params))

    # f32 MXU operands: tight check against the reference.
    out_f32 = jax.block_until_ready(down_forward(x, *params, compute_dtype=jnp.float32))
    assert out_f32.shape == (N, Cout, H // 2, W // 2), out_f32.shape
    assert jnp.allclose(out_f32, ref, atol=1e-3, rtol=1e-3), \
        float(jnp.max(jnp.abs(out_f32 - ref)))

    # bf16 MXU operands (default fast path on v6e/v7x), f32 accumulation: loose check.
    out_bf16 = jax.block_until_ready(down_forward(x, *params))
    assert out_bf16.shape == (N, Cout, H // 2, W // 2), out_bf16.shape
    assert jnp.allclose(out_bf16, ref, atol=5e-2, rtol=5e-2), \
        float(jnp.max(jnp.abs(out_bf16 - ref)))

    print("KERNEL_OK")
</pallas_src>

<mosaic_0001>
module attributes {stable_mosaic.version = 11 : i64} {
  func.func @_down_kernel(%arg0: i32, %arg1: memref<1x2x2x8x64xf32, #tpu.memory_space<vmem>>, %arg2: memref<3x64x128xf32, #tpu.memory_space<vmem>>, %arg3: memref<3x128x128xf32, #tpu.memory_space<vmem>>, %arg4: memref<1x128xf32, #tpu.memory_space<vmem>>, %arg5: memref<1x128xf32, #tpu.memory_space<vmem>>, %arg6: memref<1x8x128xf32, #tpu.memory_space<vmem>>) attributes {dimension_semantics = [#tpu.dimension_semantics<parallel>], iteration_bounds = array<i64: 1>, scalar_prefetch = 0 : i64, scratch_operands = 0 : i64, tpu.core_type = #tpu.core_type<tc>, window_params = [{transform_indices = @transform_0, window_bounds = array<i64: 1, 2, 2, 8, 64>}, {pipeline_mode = #tpu.pipeline_mode<synchronous>, transform_indices = @transform_1, window_bounds = array<i64: 3, 64, 128>}, {pipeline_mode = #tpu.pipeline_mode<synchronous>, transform_indices = @transform_2, window_bounds = array<i64: 3, 128, 128>}, {pipeline_mode = #tpu.pipeline_mode<synchronous>, transform_indices = @transform_3, window_bounds = array<i64: 1, 128>}, {pipeline_mode = #tpu.pipeline_mode<synchronous>, transform_indices = @transform_4, window_bounds = array<i64: 1, 128>}, {transform_indices = @transform_5, window_bounds = array<i64: 1, 8, 128>}]} {
    %c0 = arith.constant 0 : index
    %c0_0 = arith.constant 0 : index
    %c0_1 = arith.constant 0 : index
    %c0_2 = arith.constant 0 : index
    %c0_3 = arith.constant 0 : index
    %0 = vector.load %arg1[%c0, %c0_0, %c0_1, %c0_2, %c0_3] : memref<1x2x2x8x64xf32, #tpu.memory_space<vmem>>, vector<1x1x1x8x64xf32>
    %1 = vector.shape_cast %0 : vector<1x1x1x8x64xf32> to vector<8x64xf32>
    %c0_4 = arith.constant 0 : index
    %c0_5 = arith.constant 0 : index
    %c1 = arith.constant 1 : index
    %c0_6 = arith.constant 0 : index
    %c0_7 = arith.constant 0 : index
    %2 = vector.load %arg1[%c0_4, %c0_5, %c1, %c0_6, %c0_7] : memref<1x2x2x8x64xf32, #tpu.memory_space<vmem>>, vector<1x1x1x8x64xf32>
    %3 = vector.shape_cast %2 : vector<1x1x1x8x64xf32> to vector<8x64xf32>
    %4 = arith.maximumf %1, %3 : vector<8x64xf32>
    %c0_8 = arith.constant 0 : index
    %c1_9 = arith.constant 1 : index
    %c0_10 = arith.constant 0 : index
    %c0_11 = arith.constant 0 : index
    %c0_12 = arith.constant 0 : index
    %5 = vector.load %arg1[%c0_8, %c1_9, %c0_10, %c0_11, %c0_12] : memref<1x2x2x8x64xf32, #tpu.memory_space<vmem>>, vector<1x1x1x8x64xf32>
    %6 = vector.shape_cast %5 : vector<1x1x1x8x64xf32> to vector<8x64xf32>
    %c0_13 = arith.constant 0 : index
    %c1_14 = arith.constant 1 : index
    %c1_15 = arith.constant 1 : index
    %c0_16 = arith.constant 0 : index
    %c0_17 = arith.constant 0 : index
    %7 = vector.load %arg1[%c0_13, %c1_14, %c1_15, %c0_16, %c0_17] : memref<1x2x2x8x64xf32, #tpu.memory_space<vmem>>, vector<1x1x1x8x64xf32>
    %8 = vector.shape_cast %7 : vector<1x1x1x8x64xf32> to vector<8x64xf32>
    %9 = arith.maximumf %6, %8 : vector<8x64xf32>
    %10 = arith.maximumf %4, %9 : vector<8x64xf32>
    %cst = arith.constant 0.000000e+00 : f32
    %11 = vector.broadcast %cst : f32 to vector<1x64xf32>
    %12 = tpu.concatenate %11, %10, %11 in 0 : vector<1x64xf32>, vector<8x64xf32>, vector<1x64xf32> -> vector<10x64xf32>
    %13 = vector.extract_strided_slice %12 {offsets = [0, 0], sizes = [8, 64], strides = [1, 1]} : vector<10x64xf32> to vector<8x64xf32>
    %c0_18 = arith.constant 0 : index
    %c0_19 = arith.constant 0 : index
    %c0_20 = arith.constant 0 : index
    %14 = vector.load %arg2[%c0_18, %c0_19, %c0_20] : memref<3x64x128xf32, #tpu.memory_space<vmem>>, vector<1x64x128xf32>
    %15 = vector.shape_cast %14 : vector<1x64x128xf32> to vector<64x128xf32>
    %cst_21 = arith.constant dense<0.000000e+00> : vector<8x128xf32>
    %16 = tpu.matmul %13, %15, %cst_21 {dimension_numbers = #tpu.dot_dimension_numbers<[1], [0], [0], [1], [0, 0, 1, 1], [], []>} : vector<8x64xf32>, vector<64x128xf32>, vector<8x128xf32> -> vector<8x128xf32>
    %17 = vector.extract_strided_slice %12 {offsets = [1, 0], sizes = [8, 64], strides = [1, 1]} : vector<10x64xf32> to vector<8x64xf32>
    %c1_22 = arith.constant 1 : index
    %c0_23 = arith.constant 0 : index
    %c0_24 = arith.constant 0 : index
    %18 = vector.load %arg2[%c1_22, %c0_23, %c0_24] : memref<3x64x128xf32, #tpu.memory_space<vmem>>, vector<1x64x128xf32>
    %19 = vector.shape_cast %18 : vector<1x64x128xf32> to vector<64x128xf32>
    %cst_25 = arith.constant dense<0.000000e+00> : vector<8x128xf32>
    %20 = tpu.matmul %17, %19, %cst_25 {dimension_numbers = #tpu.dot_dimension_numbers<[1], [0], [0], [1], [0, 0, 1, 1], [], []>} : vector<8x64xf32>, vector<64x128xf32>, vector<8x128xf32> -> vector<8x128xf32>
    %21 = arith.addf %16, %20 : vector<8x128xf32>
    %22 = vector.extract_strided_slice %12 {offsets = [2, 0], sizes = [8, 64], strides = [1, 1]} : vector<10x64xf32> to vector<8x64xf32>
    %c2 = arith.constant 2 : index
    %c0_26 = arith.constant 0 : index
    %c0_27 = arith.constant 0 : index
    %23 = vector.load %arg2[%c2, %c0_26, %c0_27] : memref<3x64x128xf32, #tpu.memory_space<vmem>>, vector<1x64x128xf32>
    %24 = vector.shape_cast %23 : vector<1x64x128xf32> to vector<64x128xf32>
    %cst_28 = arith.constant dense<0.000000e+00> : vector<8x128xf32>
    %25 = tpu.matmul %22, %24, %cst_28 {dimension_numbers = #tpu.dot_dimension_numbers<[1], [0], [0], [1], [0, 0, 1, 1], [], []>} : vector<8x64xf32>, vector<64x128xf32>, vector<8x128xf32> -> vector<8x128xf32>
    %26 = arith.addf %21, %25 : vector<8x128xf32>
    %c0_29 = arith.constant 0 : index
    %c0_30 = arith.constant 0 : index
    %27 = vector.load %arg4[%c0_29, %c0_30] : memref<1x128xf32, #tpu.memory_space<vmem>>, vector<1x128xf32>
    %28 = vector.broadcast %27 : vector<1x128xf32> to vector<8x128xf32>
    %29 = arith.addf %26, %28 : vector<8x128xf32>
    %cst_31 = arith.constant 0.000000e+00 : f32
    %30 = vector.broadcast %cst_31 : f32 to vector<8x128xf32>
    %31 = arith.maximumf %29, %30 : vector<8x128xf32>
    %cst_32 = arith.constant 0.000000e+00 : f32
    %32 = vector.broadcast %cst_32 : f32 to vector<1x128xf32>
    %33 = tpu.concatenate %32, %31, %32 in 0 : vector<1x128xf32>, vector<8x128xf32>, vector<1x128xf32> -> vector<10x128xf32>
    %34 = vector.extract_strided_slice %33 {offsets = [0, 0], sizes = [8, 128], strides = [1, 1]} : vector<10x128xf32> to vector<8x128xf32>
    %c0_33 = arith.constant 0 : index
    %c0_34 = arith.constant 0 : index
    %c0_35 = arith.constant 0 : index
    %35 = vector.load %arg3[%c0_33, %c0_34, %c0_35] : memref<3x128x128xf32, #tpu.memory_space<vmem>>, vector<1x128x128xf32>
    %36 = vector.shape_cast %35 : vector<1x128x128xf32> to vector<128x128xf32>
    %cst_36 = arith.constant dense<0.000000e+00> : vector<8x128xf32>
    %37 = tpu.matmul %34, %36, %cst_36 {dimension_numbers = #tpu.dot_dimension_numbers<[1], [0], [0], [1], [0, 0, 1, 1], [], []>} : vector<8x128xf32>, vector<128x128xf32>, vector<8x128xf32> -> vector<8x128xf32>
    %38 = vector.extract_strided_slice %33 {offsets = [1, 0], sizes = [8, 128], strides = [1, 1]} : vector<10x128xf32> to vector<8x128xf32>
    %c1_37 = arith.constant 1 : index
    %c0_38 = arith.constant 0 : index
    %c0_39 = arith.constant 0 : index
    %39 = vector.load %arg3[%c1_37, %c0_38, %c0_39] : memref<3x128x128xf32, #tpu.memory_space<vmem>>, vector<1x128x128xf32>
    %40 = vector.shape_cast %39 : vector<1x128x128xf32> to vector<128x128xf32>
    %cst_40 = arith.constant dense<0.000000e+00> : vector<8x128xf32>
    %41 = tpu.matmul %38, %40, %cst_40 {dimension_numbers = #tpu.dot_dimension_numbers<[1], [0], [0], [1], [0, 0, 1, 1], [], []>} : vector<8x128xf32>, vector<128x128xf32>, vector<8x128xf32> -> vector<8x128xf32>
    %42 = arith.addf %37, %41 : vector<8x128xf32>
    %43 = vector.extract_strided_slice %33 {offsets = [2, 0], sizes = [8, 128], strides = [1, 1]} : vector<10x128xf32> to vector<8x128xf32>
    %c2_41 = arith.constant 2 : index
    %c0_42 = arith.constant 0 : index
    %c0_43 = arith.constant 0 : index
    %44 = vector.load %arg3[%c2_41, %c0_42, %c0_43] : memref<3x128x128xf32, #tpu.memory_space<vmem>>, vector<1x128x128xf32>
    %45 = vector.shape_cast %44 : vector<1x128x128xf32> to vector<128x128xf32>
    %cst_44 = arith.constant dense<0.000000e+00> : vector<8x128xf32>
    %46 = tpu.matmul %43, %45, %cst_44 {dimension_numbers = #tpu.dot_dimension_numbers<[1], [0], [0], [1], [0, 0, 1, 1], [], []>} : vector<8x128xf32>, vector<128x128xf32>, vector<8x128xf32> -> vector<8x128xf32>
    %47 = arith.addf %42, %46 : vector<8x128xf32>
    %c0_45 = arith.constant 0 : index
    %c0_46 = arith.constant 0 : index
    %48 = vector.load %arg5[%c0_45, %c0_46] : memref<1x128xf32, #tpu.memory_space<vmem>>, vector<1x128xf32>
    %49 = vector.broadcast %48 : vector<1x128xf32> to vector<8x128xf32>
    %50 = arith.addf %47, %49 : vector<8x128xf32>
    %cst_47 = arith.constant 0.000000e+00 : f32
    %51 = vector.broadcast %cst_47 : f32 to vector<8x128xf32>
    %52 = arith.maximumf %50, %51 : vector<8x128xf32>
    %c0_48 = arith.constant 0 : index
    %c0_49 = arith.constant 0 : index
    %c0_50 = arith.constant 0 : index
    %53 = vector.load %arg6[%c0_48, %c0_49, %c0_50] : memref<1x8x128xf32, #tpu.memory_space<vmem>>, vector<1x8x128xf32>
    %54 = vector.shape_cast %53 : vector<1x8x128xf32> to vector<8x128xf32>
    %55 = vector.shape_cast %52 : vector<8x128xf32> to vector<1x8x128xf32>
    tpu.vector_store %arg6[%c0_48, %c0_49, %c0_50], %55 {strides = array<i32>} : memref<1x8x128xf32, #tpu.memory_space<vmem>>, vector<1x8x128xf32>,
    return
  }
  func.func @transform_0(%arg0: i32) -> (i32, i32, i32, i32, i32) {
    %c0_i32 = arith.constant 0 : i32
    %c0_i32_0 = arith.constant 0 : i32
    %c0_i32_1 = arith.constant 0 : i32
    %c0_i32_2 = arith.constant 0 : i32
    %c0_i32_3 = arith.constant 0 : i32
    return %arg0, %c0_i32, %c0_i32_0, %c0_i32_1, %c0_i32_2 : i32, i32, i32, i32, i32
  }
  func.func @transform_1(%arg0: i32) -> (i32, i32, i32) {
    %c0_i32 = arith.constant 0 : i32
    %c0_i32_0 = arith.constant 0 : i32
    %c0_i32_1 = arith.constant 0 : i32
    %c0_i32_2 = arith.constant 0 : i32
    return %c0_i32, %c0_i32_0, %c0_i32_1 : i32, i32, i32
  }
  func.func @transform_2(%arg0: i32) -> (i32, i32, i32) {
    %c0_i32 = arith.constant 0 : i32
    %c0_i32_0 = arith.constant 0 : i32
    %c0_i32_1 = arith.constant 0 : i32
    %c0_i32_2 = arith.constant 0 : i32
    return %c0_i32, %c0_i32_0, %c0_i32_1 : i32, i32, i32
  }
  func.func @transform_3(%arg0: i32) -> (i32, i32) {
    %c0_i32 = arith.constant 0 : i32
    %c0_i32_0 = arith.constant 0 : i32
    %c0_i32_1 = arith.constant 0 : i32
    return %c0_i32, %c0_i32_0 : i32, i32
  }
  func.func @transform_4(%arg0: i32) -> (i32, i32) {
    %c0_i32 = arith.constant 0 : i32
    %c0_i32_0 = arith.constant 0 : i32
    %c0_i32_1 = arith.constant 0 : i32
    return %c0_i32, %c0_i32_0 : i32, i32
  }
  func.func @transform_5(%arg0: i32) -> (i32, i32, i32) {
    %c0_i32 = arith.constant 0 : i32
    %c0_i32_0 = arith.constant 0 : i32
    %c0_i32_1 = arith.constant 0 : i32
    return %arg0, %c0_i32, %c0_i32_0 : i32, i32, i32
  }
}

</mosaic_0001>

<llo_original>
// kernel: tpu_custom_call.1
$region0: #{tpu_custom_call.1}
  #allocation0 [shape = 'u32[]', space=smem, size = 0x4, offset = 0x4, fixed_abs, tag = 'smem constant byte address 0x4 - core index']
  #allocation1 [shape = 'u32[144,128]{1,0:T(1,128)}', space=vmem, size = 0x12000, scoped, tag = 'internal scratch']
  %s0 = inlined_call_operand.hbm [shape: f32[1,2,2,8,64], index: 0, kind: input, shape index: {}]
  %s1 = inlined_call_operand.hbm [shape: f32[3,64,128], index: 1, kind: input, shape index: {}]
  %s2 = inlined_call_operand.hbm [shape: f32[3,128,128], index: 2, kind: input, shape index: {}]
  %s3 = inlined_call_operand.vmem [shape: f32[1,128], index: 3, kind: input, shape index: {}]
  %s4 = inlined_call_operand.vmem [shape: f32[1,128], index: 4, kind: input, shape index: {}]
  %s5 = inlined_call_operand.hbm [shape: f32[1,8,128], index: 5, kind: output, shape index: {}]
  %s6 = sld [smem:[#allocation0]]
  $region42: #{tpu_custom_call.1} parent=0
    _
  %s8 = ssub.s32 1, %s6
  %s9 = scalar_select 0, %s8, %s6
  $region1: #{tpu_custom_call.1} parent=0
    #allocation2 [shape = 'u8[16384]{0}', space=vmem, size = 0x4000, scoped, tag = 'input window, operand 0, single buffered']
    #allocation3 [shape = 's32[1]{0}', space=sflag, size = 0x4, scoped, tag = 'scoped memory for tpu_custom_call.1']
    #allocation4 [shape = 's32[1]{0}', space=sflag, size = 0x4, scoped, tag = 'scoped memory for tpu_custom_call.1']
    #allocation5 [shape = 'u8[98304]{0}', space=vmem, size = 0x18000, scoped, tag = 'input window, operand 1, single buffered']
    #allocation6 [shape = 's32[1]{0}', space=sflag, size = 0x4, scoped, tag = 'scoped memory for tpu_custom_call.1']
    #allocation7 [shape = 'u8[196608]{0}', space=vmem, size = 0x30000, scoped, tag = 'input window, operand 2, single buffered']
    #allocation8 [shape = 'u8[4096]{0}', space=vmem, size = 0x1000, scoped, tag = 'output window, operand 0, single buffered']
    %10 = vsyncpa [#allocation3], 0
    %11 = vsyncpa [#allocation6], 0
    %12 = vsyncpa [#allocation4], 0
    // Predicated region
    $region2: #{tpu_custom_call.1} parent=1 // pred_check
      _
    $region3: #{tpu_custom_call.1} parent=1 // pred_check_branch
      %14 = sbr.rel (0) target = $region5
    $region4: #{tpu_custom_call.1} parent=1 // pred_region
      %s16 = ssub.s32 512, 512
      %17 = vsyncadd [#allocation3], %s16
      %s18 = sshll.u32 [#allocation2], 4
      %s19 = int_to_ptr.vmem [resolvable:$true] %s18
      %24 = dma.hbm_to_vmem [thread:$0]  %s0, 512, %s19, [#allocation3], 128, 128, 8
    $region5: #{tpu_custom_call.1} parent=1 // pred_fallthru
      _
    // Predicated region
    $region6: #{tpu_custom_call.1} parent=1 // pred_check
      _
    $region7: #{tpu_custom_call.1} parent=1 // pred_check_branch
      %26 = sbr.rel (0) target = $region9
    $region8: #{tpu_custom_call.1} parent=1 // pred_region
      %s28 = ssub.s32 3072, 3072
      %29 = vsyncadd [#allocation6], %s28
      %s30 = sshll.u32 [#allocation5], 4
      %s31 = int_to_ptr.vmem [resolvable:$true] %s30
      %36 = dma.hbm_to_vmem [thread:$0]  %s1, 3072, %s31, [#allocation6], 128, 128, 8
    $region9: #{tpu_custom_call.1} parent=1 // pred_fallthru
      _
    // Predicated region
    $region10: #{tpu_custom_call.1} parent=1 // pred_check
      _
    $region11: #{tpu_custom_call.1} parent=1 // pred_check_branch
      %38 = sbr.rel (0) target = $region13
    $region12: #{tpu_custom_call.1} parent=1 // pred_region
      %s40 = ssub.s32 6144, 6144
      %41 = vsyncadd [#allocation6], %s40
      %s42 = sshll.u32 [#allocation7], 4
      %s43 = int_to_ptr.vmem [resolvable:$true] %s42
      %48 = dma.hbm_to_vmem [thread:$0]  %s2, 6144, %s43, [#allocation6], 128, 128, 8
    $region13: #{tpu_custom_call.1} parent=1 // pred_fallthru
      _
    // Predicated region
    $region14: #{tpu_custom_call.1} parent=1 // pred_check
      _
    $region15: #{tpu_custom_call.1} parent=1 // pred_check_branch
      %50 = sbr.rel (0) target = $region17
    $region16: #{tpu_custom_call.1} parent=1 // pred_region
      _
    $region17: #{tpu_custom_call.1} parent=1 // pred_fallthru
      _
    // Predicated region
    $region18: #{tpu_custom_call.1} parent=1 // pred_check
      _
    $region19: #{tpu_custom_call.1} parent=1 // pred_check_branch
      %52 = sbr.rel (0) target = $region21
    $region20: #{tpu_custom_call.1} parent=1 // pred_region
      _
    $region21: #{tpu_custom_call.1} parent=1 // pred_fallthru
      _
    // Predicated region
    $region22: #{tpu_custom_call.1} parent=1 // pred_check
      _
    $region23: #{tpu_custom_call.1} parent=1 // pred_check_branch
      %54 = sbr.rel (0) target = $region25
    $region24: #{tpu_custom_call.1} parent=1 // pred_region
      %55 = dma.done [#allocation3], 512
    $region25: #{tpu_custom_call.1} parent=1 // pred_fallthru
      _
    // Predicated region
    $region26: #{tpu_custom_call.1} parent=1 // pred_check
      _
    $region27: #{tpu_custom_call.1} parent=1 // pred_check_branch
      %57 = sbr.rel (0) target = $region29
    $region28: #{tpu_custom_call.1} parent=1 // pred_region
      %58 = dma.done [#allocation6], 3072
    $region29: #{tpu_custom_call.1} parent=1 // pred_fallthru
      _
    // Predicated region
    $region30: #{tpu_custom_call.1} parent=1 // pred_check
      _
    $region31: #{tpu_custom_call.1} parent=1 // pred_check_branch
      %60 = sbr.rel (0) target = $region33
    $region32: #{tpu_custom_call.1} parent=1 // pred_region
      %61 = dma.done [#allocation6], 6144
    $region33: #{tpu_custom_call.1} parent=1 // pred_fallthru
      _
    %v62 = vld [vmem:[#allocation2] sm:$0xff]
    %s63 = scalar_lea.vmem [#allocation2], 8
    %v64 = vld [vmem:[%s63] sm:$0xff]
    %v65 = vmax.f32 %v62, %v64
    %s66 = scalar_lea.vmem [#allocation2], 16
    %v67 = vld [vmem:[%s66] sm:$0xff]
    %s68 = scalar_lea.vmem [#allocation2], 24
    %v69 = vld [vmem:[%s68] sm:$0xff]
    %v70 = vmax.f32 %v67, %v69
    %v71 = vmax.f32 %v65, %v70
    %v73 = vrot.slane %v71, 7
    %vm75 = vcmask 1040384
    %v76 = vsel %vm75, 0.0, %v73
    %v77 = vsel %vm75, %v73, 0.0
    %v78 = vld [vmem:[#allocation5] sm:$0xff]
    %v79 = vld [vmem:[#allocation5 + $0x8] sm:$0xff]
    %v80 = vld [vmem:[#allocation5 + $0x10] sm:$0xff]
    %v81 = vld [vmem:[#allocation5 + $0x18] sm:$0xff]
    %v82 = vld [vmem:[#allocation5 + $0x20] sm:$0xff]
    %v83 = vld [vmem:[#allocation5 + $0x28] sm:$0xff]
    %v84 = vld [vmem:[#allocation5 + $0x30] sm:$0xff]
    %v85 = vld [vmem:[#allocation5 + $0x38] sm:$0xff]
    %s86 = scalar_lea.vmem [#allocation5], 64
    %v87 = vld [vmem:[%s86] sm:$0xff]
    %v88 = vld [vmem:[%s86 + $0x8] sm:$0xff]
    %v89 = vld [vmem:[%s86 + $0x10] sm:$0xff]
    %v90 = vld [vmem:[%s86 + $0x18] sm:$0xff]
    %v91 = vld [vmem:[%s86 + $0x20] sm:$0xff]
    %v92 = vld [vmem:[%s86 + $0x28] sm:$0xff]
    %v93 = vld [vmem:[%s86 + $0x30] sm:$0xff]
    %v94 = vld [vmem:[%s86 + $0x38] sm:$0xff]
    %vm97 = vcmask 1046528
    %v98 = vrot.slane %v76, 1
    %v99 = vrot.slane %v77, 1
    %v100 = vsel %vm97, %v98, %v99
    %vm101 = vcmask 523264
    %v102 = vsel %vm101, %v100, 0
    %104 = vmatprep.subr.mxu0 0.0
    %105 = vmatpush1.msra.mxu0 0.0
    %106 = vmatprep.subr.mxu0 0.0
    %107 = vmatpush1.msra.mxu0 0.0
    %108 = vmatprep.subr.mxu0 0.0
    %109 = vmatpush1.msra.mxu0 0.0
    %110 = vmatprep.subr.mxu0 0.0
    %111 = vmatpush1.msra.mxu0 0.0
    %112 = vmatprep.subr.mxu0 0.0
    %113 = vmatpush1.msra.mxu0 0.0
    %114 = vmatprep.subr.mxu0 0.0
    %115 = vmatpush1.msra.mxu0 0.0
    %116 = vmatprep.subr.mxu0 0.0
    %117 = vmatpush1.msra.mxu0 0.0
    %118 = vmatprep.subr.mxu0 0.0
    %119 = vmatpush1.msra.mxu0 0.0
    %120 = vmatprep.subr.mxu0 0.0
    %121 = vmatpush1.msra.mxu0 %v94
    %122 = vmatprep.subr.mxu0 0.0
    %123 = vmatpush1.msra.mxu0 %v93
    %124 = vmatprep.subr.mxu0 0.0
    %125 = vmatpush1.msra.mxu0 %v92
    %126 = vmatprep.subr.mxu0 0.0
    %127 = vmatpush1.msra.mxu0 %v91
    %128 = vmatprep.subr.mxu0 0.0
    %129 = vmatpush1.msra.mxu0 %v90
    %130 = vmatprep.subr.mxu0 0.0
    %131 = vmatpush1.msra.mxu0 %v89
    %132 = vmatprep.subr.mxu0 0.0
    %133 = vmatpush1.msra.mxu0 %v88
    %134 = vmatprep.subr.mxu0 0.0
    %135 = vmatpush1.msra.mxu0 %v87
    %136 = vmatprep.subr.mxu0 0.0
    %137 = vmatpush2.msra.mxu0 0.0
    %138 = vmatprep.subr.mxu0 0.0
    %139 = vmatpush2.msra.mxu0 0.0
    %140 = vmatprep.subr.mxu0 0.0
    %141 = vmatpush2.msra.mxu0 0.0
    %142 = vmatprep.subr.mxu0 0.0
    %143 = vmatpush2.msra.mxu0 0.0
    %144 = vmatprep.subr.mxu0 0.0
    %145 = vmatpush2.msra.mxu0 0.0
    %146 = vmatprep.subr.mxu0 0.0
    %147 = vmatpush2.msra.mxu0 0.0
    %148 = vmatprep.subr.mxu0 0.0
    %149 = vmatpush2.msra.mxu0 0.0
    %150 = vmatprep.subr.mxu0 0.0
    %151 = vmatpush2.msra.mxu0 0.0
    %152 = vmatprep.subr.mxu0 0.0
    %153 = vmatpush2.msra.mxu0 0.0
    %154 = vmatprep.subr.mxu0 0.0
    %155 = vmatpush2.msra.mxu0 0.0
    %156 = vmatprep.subr.mxu0 0.0
    %157 = vmatpush2.msra.mxu0 0.0
    %158 = vmatprep.subr.mxu0 0.0
    %159 = vmatpush2.msra.mxu0 0.0
    %160 = vmatprep.subr.mxu0 0.0
    %161 = vmatpush2.msra.mxu0 0.0
    %162 = vmatprep.subr.mxu0 0.0
    %163 = vmatpush2.msra.mxu0 0.0
    %164 = vmatprep.subr.mxu0 0.0
    %165 = vmatpush2.msra.mxu0 0.0
    %166 = vmatprep.subr.mxu0 0.0
    %167 = vmatpush2.msra.mxu0 0.0
    %168 = vmatprep.mubr.f32.mxu0 0.0
    %169 = vmatmul.mubr.f32.gmra.mxu0 %v102
    %v170 = vpop.f32.mrf.mxu0
    %v171 = vadd.f32 0.0, %v170
    %v172 = vpop.f32.mrf.mxu0
    %173 = vdwg.mxu0
    %v174 = vsel %vm101, %v76, 0
    %176 = vmatprep.subr.mxu0 0.0
    %177 = vmatpush1.msra.mxu0 0.0
    %178 = vmatprep.subr.mxu0 0.0
    %179 = vmatpush1.msra.mxu0 0.0
    %180 = vmatprep.subr.mxu0 0.0
    %181 = vmatpush1.msra.mxu0 0.0
    %182 = vmatprep.subr.mxu0 0.0
    %183 = vmatpush1.msra.mxu0 0.0
    %184 = vmatprep.subr.mxu0 0.0
    %185 = vmatpush1.msra.mxu0 0.0
    %186 = vmatprep.subr.mxu0 0.0
    %187 = vmatpush1.msra.mxu0 0.0
    %188 = vmatprep.subr.mxu0 0.0
    %189 = vmatpush1.msra.mxu0 0.0
    %190 = vmatprep.subr.mxu0 0.0
    %191 = vmatpush1.msra.mxu0 0.0
    %192 = vmatprep.subr.mxu0 0.0
    %193 = vmatpush1.msra.mxu0 %v85
    %194 = vmatprep.subr.mxu0 0.0
    %195 = vmatpush1.msra.mxu0 %v84
    %196 = vmatprep.subr.mxu0 0.0
    %197 = vmatpush1.msra.mxu0 %v83
    %198 = vmatprep.subr.mxu0 0.0
    %199 = vmatpush1.msra.mxu0 %v82
    %200 = vmatprep.subr.mxu0 0.0
    %201 = vmatpush1.msra.mxu0 %v81
    %202 = vmatprep.subr.mxu0 0.0
    %203 = vmatpush1.msra.mxu0 %v80
    %204 = vmatprep.subr.mxu0 0.0
    %205 = vmatpush1.msra.mxu0 %v79
    %206 = vmatprep.subr.mxu0 0.0
    %207 = vmatpush1.msra.mxu0 %v78
    %208 = vmatprep.subr.mxu0 0.0
    %209 = vmatpush2.msra.mxu0 0.0
    %210 = vmatprep.subr.mxu0 0.0
    %211 = vmatpush2.msra.mxu0 0.0
    %212 = vmatprep.subr.mxu0 0.0
    %213 = vmatpush2.msra.mxu0 0.0
    %214 = vmatprep.subr.mxu0 0.0
    %215 = vmatpush2.msra.mxu0 0.0
    %216 = vmatprep.subr.mxu0 0.0
    %217 = vmatpush2.msra.mxu0 0.0
    %218 = vmatprep.subr.mxu0 0.0
    %219 = vmatpush2.msra.mxu0 0.0
    %220 = vmatprep.subr.mxu0 0.0
    %221 = vmatpush2.msra.mxu0 0.0
    %222 = vmatprep.subr.mxu0 0.0
    %223 = vmatpush2.msra.mxu0 0.0
    %224 = vmatprep.subr.mxu0 0.0
    %225 = vmatpush2.msra.mxu0 0.0
    %226 = vmatprep.subr.mxu0 0.0
    %227 = vmatpush2.msra.mxu0 0.0
    %228 = vmatprep.subr.mxu0 0.0
    %229 = vmatpush2.msra.mxu0 0.0
    %230 = vmatprep.subr.mxu0 0.0
    %231 = vmatpush2.msra.mxu0 0.0
    %232 = vmatprep.subr.mxu0 0.0
    %233 = vmatpush2.msra.mxu0 0.0
    %234 = vmatprep.subr.mxu0 0.0
    %235 = vmatpush2.msra.mxu0 0.0
    %236 = vmatprep.subr.mxu0 0.0
    %237 = vmatpush2.msra.mxu0 0.0
    %238 = vmatprep.subr.mxu0 0.0
    %239 = vmatpush2.msra.mxu0 0.0
    %240 = vmatprep.mubr.f32.mxu0 0.0
    %241 = vmatmul.mubr.f32.gmra.mxu0 %v174
    %v242 = vpop.f32.mrf.mxu0
    %v243 = vadd.f32 %v171, %v242
    %v244 = vpop.f32.mrf.mxu0
    %245 = vdwg.mxu0
    %s246 = scalar_lea.vmem [#allocation5], 128
    %v247 = vld [vmem:[%s246] sm:$0xff]
    %v248 = vld [vmem:[%s246 + $0x8] sm:$0xff]
    %v249 = vld [vmem:[%s246 + $0x10] sm:$0xff]
    %v250 = vld [vmem:[%s246 + $0x18] sm:$0xff]
    %v251 = vld [vmem:[%s246 + $0x20] sm:$0xff]
    %v252 = vld [vmem:[%s246 + $0x28] sm:$0xff]
    %v253 = vld [vmem:[%s246 + $0x30] sm:$0xff]
    %v254 = vld [vmem:[%s246 + $0x38] sm:$0xff]
    %vm255 = vcmask 1045504
    %v256 = vrot.slane %v76, 2
    %v257 = vrot.slane %v77, 2
    %v258 = vsel %vm255, %v256, %v257
    %v259 = vsel %vm101, %v258, 0
    %261 = vmatprep.subr.mxu0 0.0
    %262 = vmatpush1.msra.mxu0 0.0
    %263 = vmatprep.subr.mxu0 0.0
    %264 = vmatpush1.msra.mxu0 0.0
    %265 = vmatprep.subr.mxu0 0.0
    %266 = vmatpush1.msra.mxu0 0.0
    %267 = vmatprep.subr.mxu0 0.0
    %268 = vmatpush1.msra.mxu0 0.0
    %269 = vmatprep.subr.mxu0 0.0
    %270 = vmatpush1.msra.mxu0 0.0
    %271 = vmatprep.subr.mxu0 0.0
    %272 = vmatpush1.msra.mxu0 0.0
    %273 = vmatprep.subr.mxu0 0.0
    %274 = vmatpush1.msra.mxu0 0.0
    %275 = vmatprep.subr.mxu0 0.0
    %276 = vmatpush1.msra.mxu0 0.0
    %277 = vmatprep.subr.mxu0 0.0
    %278 = vmatpush1.msra.mxu0 %v254
    %279 = vmatprep.subr.mxu0 0.0
    %280 = vmatpush1.msra.mxu0 %v253
    %281 = vmatprep.subr.mxu0 0.0
    %282 = vmatpush1.msra.mxu0 %v252
    %283 = vmatprep.subr.mxu0 0.0
    %284 = vmatpush1.msra.mxu0 %v251
    %285 = vmatprep.subr.mxu0 0.0
    %286 = vmatpush1.msra.mxu0 %v250
    %287 = vmatprep.subr.mxu0 0.0
    %288 = vmatpush1.msra.mxu0 %v249
    %289 = vmatprep.subr.mxu0 0.0
    %290 = vmatpush1.msra.mxu0 %v248
    %291 = vmatprep.subr.mxu0 0.0
    %292 = vmatpush1.msra.mxu0 %v247
    %293 = vmatprep.subr.mxu0 0.0
    %294 = vmatpush2.msra.mxu0 0.0
    %295 = vmatprep.subr.mxu0 0.0
    %296 = vmatpush2.msra.mxu0 0.0
    %297 = vmatprep.subr.mxu0 0.0
    %298 = vmatpush2.msra.mxu0 0.0
    %299 = vmatprep.subr.mxu0 0.0
    %300 = vmatpush2.msra.mxu0 0.0
    %301 = vmatprep.subr.mxu0 0.0
    %302 = vmatpush2.msra.mxu0 0.0
    %303 = vmatprep.subr.mxu0 0.0
    %304 = vmatpush2.msra.mxu0 0.0
    %305 = vmatprep.subr.mxu0 0.0
    %306 = vmatpush2.msra.mxu0 0.0
    %307 = vmatprep.subr.mxu0 0.0
    %308 = vmatpush2.msra.mxu0 0.0
    %309 = vmatprep.subr.mxu0 0.0
    %310 = vmatpush2.msra.mxu0 0.0
    %311 = vmatprep.subr.mxu0 0.0
    %312 = vmatpush2.msra.mxu0 0.0
    %313 = vmatprep.subr.mxu0 0.0
    %314 = vmatpush2.msra.mxu0 0.0
    %315 = vmatprep.subr.mxu0 0.0
    %316 = vmatpush2.msra.mxu0 0.0
    %317 = vmatprep.subr.mxu0 0.0
    %318 = vmatpush2.msra.mxu0 0.0
    %319 = vmatprep.subr.mxu0 0.0
    %320 = vmatpush2.msra.mxu0 0.0
    %321 = vmatprep.subr.mxu0 0.0
    %322 = vmatpush2.msra.mxu0 0.0
    %323 = vmatprep.subr.mxu0 0.0
    %324 = vmatpush2.msra.mxu0 0.0
    %325 = vmatprep.mubr.f32.mxu0 0.0
    %326 = vmatmul.mubr.f32.gmra.mxu0 %v259
    %v327 = vpop.f32.mrf.mxu0
    %v328 = vadd.f32 0.0, %v327
    %v329 = vpop.f32.mrf.mxu0
    %330 = vdwg.mxu0
    %v331 = vadd.f32 %v243, %v328
    %v332 = vld [vmem:[%s3] sm:$0x1]
    %v334 = vlaneseq
    %v335 = vshrl.u32 %v334, 7
    %v336 = vsub.s32 0, %v335
    %v337 = vrot.slane %v332, %v336
    %v339 = vadd.f32 %v331, %v337
    %v340 = vmax.f32 %v339, 0.0
    %v342 = vrot.slane %v340, 7
    %v344 = vsel %vm75, 0.0, %v342
    %v345 = vsel %vm75, %v342, 0.0
    %v346 = vld [vmem:[#allocation7] sm:$0xff]
    %v347 = vld [vmem:[#allocation7 + $0x8] sm:$0xff]
    %v348 = vld [vmem:[#allocation7 + $0x10] sm:$0xff]
    %v349 = vld [vmem:[#allocation7 + $0x18] sm:$0xff]
    %v350 = vld [vmem:[#allocation7 + $0x20] sm:$0xff]
    %v351 = vld [vmem:[#allocation7 + $0x28] sm:$0xff]
    %v352 = vld [vmem:[#allocation7 + $0x30] sm:$0xff]
    %v353 = vld [vmem:[#allocation7 + $0x38] sm:$0xff]
    %v354 = vld [vmem:[#allocation7 + $0x40] sm:$0xff]
    %v355 = vld [vmem:[#allocation7 + $0x48] sm:$0xff]
    %v356 = vld [vmem:[#allocation7 + $0x50] sm:$0xff]
    %v357 = vld [vmem:[#allocation7 + $0x58] sm:$0xff]
    %v358 = vld [vmem:[#allocation7 + $0x60] sm:$0xff]
    %v359 = vld [vmem:[#allocation7 + $0x68] sm:$0xff]
    %v360 = vld [vmem:[#allocation7 + $0x70] sm:$0xff]
    %v361 = vld [vmem:[#allocation7 + $0x78] sm:$0xff]
    %s362 = scalar_lea.vmem [#allocation7], 128
    %v363 = vld [vmem:[%s362] sm:$0xff]
    %v364 = vld [vmem:[%s362 + $0x8] sm:$0xff]
    %v365 = vld [vmem:[%s362 + $0x10] sm:$0xff]
    %v366 = vld [vmem:[%s362 + $0x18] sm:$0xff]
    %v367 = vld [vmem:[%s362 + $0x20] sm:$0xff]
    %v368 = vld [vmem:[%s362 + $0x28] sm:$0xff]
    %v369 = vld [vmem:[%s362 + $0x30] sm:$0xff]
    %v370 = vld [vmem:[%s362 + $0x38] sm:$0xff]
    %v371 = vld [vmem:[%s362 + $0x40] sm:$0xff]
    %v372 = vld [vmem:[%s362 + $0x48] sm:$0xff]
    %v373 = vld [vmem:[%s362 + $0x50] sm:$0xff]
    %v374 = vld [vmem:[%s362 + $0x58] sm:$0xff]
    %v375 = vld [vmem:[%s362 + $0x60] sm:$0xff]
    %v376 = vld [vmem:[%s362 + $0x68] sm:$0xff]
    %v377 = vld [vmem:[%s362 + $0x70] sm:$0xff]
    %v378 = vld [vmem:[%s362 + $0x78] sm:$0xff]
    %v381 = vrot.slane %v344, 1
    %v382 = vrot.slane %v345, 1
    %v383 = vsel %vm97, %v381, %v382
    %385 = vmatprep.subr.mxu0 0.0
    %386 = vmatpush1.msra.mxu0 %v378
    %387 = vmatprep.subr.mxu0 0.0
    %388 = vmatpush1.msra.mxu0 %v377
    %389 = vmatprep.subr.mxu0 0.0
    %390 = vmatpush1.msra.mxu0 %v376
    %391 = vmatprep.subr.mxu0 0.0
    %392 = vmatpush1.msra.mxu0 %v375
    %393 = vmatprep.subr.mxu0 0.0
    %394 = vmatpush1.msra.mxu0 %v374
    %395 = vmatprep.subr.mxu0 0.0
    %396 = vmatpush1.msra.mxu0 %v373
    %397 = vmatprep.subr.mxu0 0.0
    %398 = vmatpush1.msra.mxu0 %v372
    %399 = vmatprep.subr.mxu0 0.0
    %400 = vmatpush1.msra.mxu0 %v371
    %401 = vmatprep.subr.mxu0 0.0
    %402 = vmatpush1.msra.mxu0 %v370
    %403 = vmatprep.subr.mxu0 0.0
    %404 = vmatpush1.msra.mxu0 %v369
    %405 = vmatprep.subr.mxu0 0.0
    %406 = vmatpush1.msra.mxu0 %v368
    %407 = vmatprep.subr.mxu0 0.0
    %408 = vmatpush1.msra.mxu0 %v367
    %409 = vmatprep.subr.mxu0 0.0
    %410 = vmatpush1.msra.mxu0 %v366
    %411 = vmatprep.subr.mxu0 0.0
    %412 = vmatpush1.msra.mxu0 %v365
    %413 = vmatprep.subr.mxu0 0.0
    %414 = vmatpush1.msra.mxu0 %v364
    %415 = vmatprep.subr.mxu0 0.0
    %416 = vmatpush1.msra.mxu0 %v363
    %417 = vmatprep.subr.mxu0 0.0
    %418 = vmatpush2.msra.mxu0 0.0
    %419 = vmatprep.subr.mxu0 0.0
    %420 = vmatpush2.msra.mxu0 0.0
    %421 = vmatprep.subr.mxu0 0.0
    %422 = vmatpush2.msra.mxu0 0.0
    %423 = vmatprep.subr.mxu0 0.0
    %424 = vmatpush2.msra.mxu0 0.0
    %425 = vmatprep.subr.mxu0 0.0
    %426 = vmatpush2.msra.mxu0 0.0
    %427 = vmatprep.subr.mxu0 0.0
    %428 = vmatpush2.msra.mxu0 0.0
    %429 = vmatprep.subr.mxu0 0.0
    %430 = vmatpush2.msra.mxu0 0.0
    %431 = vmatprep.subr.mxu0 0.0
    %432 = vmatpush2.msra.mxu0 0.0
    %433 = vmatprep.subr.mxu0 0.0
    %434 = vmatpush2.msra.mxu0 0.0
    %435 = vmatprep.subr.mxu0 0.0
    %436 = vmatpush2.msra.mxu0 0.0
    %437 = vmatprep.subr.mxu0 0.0
    %438 = vmatpush2.msra.mxu0 0.0
    %439 = vmatprep.subr.mxu0 0.0
    %440 = vmatpush2.msra.mxu0 0.0
    %441 = vmatprep.subr.mxu0 0.0
    %442 = vmatpush2.msra.mxu0 0.0
    %443 = vmatprep.subr.mxu0 0.0
    %444 = vmatpush2.msra.mxu0 0.0
    %445 = vmatprep.subr.mxu0 0.0
    %446 = vmatpush2.msra.mxu0 0.0
    %447 = vmatprep.subr.mxu0 0.0
    %448 = vmatpush2.msra.mxu0 0.0
    %449 = vmatprep.mubr.f32.mxu0 0.0
    %450 = vmatmul.mubr.f32.gmra.mxu0 %v383
    %v451 = vpop.f32.mrf.mxu0
    %v452 = vadd.f32 0.0, %v451
    %v453 = vpop.f32.mrf.mxu0
    %454 = vdwg.mxu0
    %455 = vmatprep.subr.mxu0 0.0
    %456 = vmatpush1.msra.mxu0 %v361
    %457 = vmatprep.subr.mxu0 0.0
    %458 = vmatpush1.msra.mxu0 %v360
    %459 = vmatprep.subr.mxu0 0.0
    %460 = vmatpush1.msra.mxu0 %v359
    %461 = vmatprep.subr.mxu0 0.0
    %462 = vmatpush1.msra.mxu0 %v358
    %463 = vmatprep.subr.mxu0 0.0
    %464 = vmatpush1.msra.mxu0 %v357
    %465 = vmatprep.subr.mxu0 0.0
    %466 = vmatpush1.msra.mxu0 %v356
    %467 = vmatprep.subr.mxu0 0.0
    %468 = vmatpush1.msra.mxu0 %v355
    %469 = vmatprep.subr.mxu0 0.0
    %470 = vmatpush1.msra.mxu0 %v354
    %471 = vmatprep.subr.mxu0 0.0
    %472 = vmatpush1.msra.mxu0 %v353
    %473 = vmatprep.subr.mxu0 0.0
    %474 = vmatpush1.msra.mxu0 %v352
    %475 = vmatprep.subr.mxu0 0.0
    %476 = vmatpush1.msra.mxu0 %v351
    %477 = vmatprep.subr.mxu0 0.0
    %478 = vmatpush1.msra.mxu0 %v350
    %479 = vmatprep.subr.mxu0 0.0
    %480 = vmatpush1.msra.mxu0 %v349
    %481 = vmatprep.subr.mxu0 0.0
    %482 = vmatpush1.msra.mxu0 %v348
    %483 = vmatprep.subr.mxu0 0.0
    %484 = vmatpush1.msra.mxu0 %v347
    %485 = vmatprep.subr.mxu0 0.0
    %486 = vmatpush1.msra.mxu0 %v346
    %487 = vmatprep.subr.mxu0 0.0
    %488 = vmatpush2.msra.mxu0 0.0
    %489 = vmatprep.subr.mxu0 0.0
    %490 = vmatpush2.msra.mxu0 0.0
    %491 = vmatprep.subr.mxu0 0.0
    %492 = vmatpush2.msra.mxu0 0.0
    %493 = vmatprep.subr.mxu0 0.0
    %494 = vmatpush2.msra.mxu0 0.0
    %495 = vmatprep.subr.mxu0 0.0
    %496 = vmatpush2.msra.mxu0 0.0
    %497 = vmatprep.subr.mxu0 0.0
    %498 = vmatpush2.msra.mxu0 0.0
    %499 = vmatprep.subr.mxu0 0.0
    %500 = vmatpush2.msra.mxu0 0.0
    %501 = vmatprep.subr.mxu0 0.0
    %502 = vmatpush2.msra.mxu0 0.0
    %503 = vmatprep.subr.mxu0 0.0
    %504 = vmatpush2.msra.mxu0 0.0
    %505 = vmatprep.subr.mxu0 0.0
    %506 = vmatpush2.msra.mxu0 0.0
    %507 = vmatprep.subr.mxu0 0.0
    %508 = vmatpush2.msra.mxu0 0.0
    %509 = vmatprep.subr.mxu0 0.0
    %510 = vmatpush2.msra.mxu0 0.0
    %511 = vmatprep.subr.mxu0 0.0
    %512 = vmatpush2.msra.mxu0 0.0
    %513 = vmatprep.subr.mxu0 0.0
    %514 = vmatpush2.msra.mxu0 0.0
    %515 = vmatprep.subr.mxu0 0.0
    %516 = vmatpush2.msra.mxu0 0.0
    %517 = vmatprep.subr.mxu0 0.0
    %518 = vmatpush2.msra.mxu0 0.0
    %519 = vmatprep.mubr.f32.mxu0 0.0
    %520 = vmatmul.mubr.f32.gmra.mxu0 %v344
    %v521 = vpop.f32.mrf.mxu0
    %v522 = vadd.f32 %v452, %v521
    %v523 = vpop.f32.mrf.mxu0
    %524 = vdwg.mxu0
    %s525 = scalar_lea.vmem [#allocation7], 256
    %v526 = vld [vmem:[%s525] sm:$0xff]
    %v527 = vld [vmem:[%s525 + $0x8] sm:$0xff]
    %v528 = vld [vmem:[%s525 + $0x10] sm:$0xff]
    %v529 = vld [vmem:[%s525 + $0x18] sm:$0xff]
    %v530 = vld [vmem:[%s525 + $0x20] sm:$0xff]
    %v531 = vld [vmem:[%s525 + $0x28] sm:$0xff]
    %v532 = vld [vmem:[%s525 + $0x30] sm:$0xff]
    %v533 = vld [vmem:[%s525 + $0x38] sm:$0xff]
    %v534 = vld [vmem:[%s525 + $0x40] sm:$0xff]
    %v535 = vld [vmem:[%s525 + $0x48] sm:$0xff]
    %v536 = vld [vmem:[%s525 + $0x50] sm:$0xff]
    %v537 = vld [vmem:[%s525 + $0x58] sm:$0xff]
    %v538 = vld [vmem:[%s525 + $0x60] sm:$0xff]
    %v539 = vld [vmem:[%s525 + $0x68] sm:$0xff]
    %v540 = vld [vmem:[%s525 + $0x70] sm:$0xff]
    %v541 = vld [vmem:[%s525 + $0x78] sm:$0xff]
    %v542 = vrot.slane %v344, 2
    %v543 = vrot.slane %v345, 2
    %v544 = vsel %vm255, %v542, %v543
    %546 = vmatprep.subr.mxu0 0.0
    %547 = vmatpush1.msra.mxu0 %v541
    %548 = vmatprep.subr.mxu0 0.0
    %549 = vmatpush1.msra.mxu0 %v540
    %550 = vmatprep.subr.mxu0 0.0
    %551 = vmatpush1.msra.mxu0 %v539
    %552 = vmatprep.subr.mxu0 0.0
    %553 = vmatpush1.msra.mxu0 %v538
    %554 = vmatprep.subr.mxu0 0.0
    %555 = vmatpush1.msra.mxu0 %v537
    %556 = vmatprep.subr.mxu0 0.0
    %557 = vmatpush1.msra.mxu0 %v536
    %558 = vmatprep.subr.mxu0 0.0
    %559 = vmatpush1.msra.mxu0 %v535
    %560 = vmatprep.subr.mxu0 0.0
    %561 = vmatpush1.msra.mxu0 %v534
    %562 = vmatprep.subr.mxu0 0.0
    %563 = vmatpush1.msra.mxu0 %v533
    %564 = vmatprep.subr.mxu0 0.0
    %565 = vmatpush1.msra.mxu0 %v532
    %566 = vmatprep.subr.mxu0 0.0
    %567 = vmatpush1.msra.mxu0 %v531
    %568 = vmatprep.subr.mxu0 0.0
    %569 = vmatpush1.msra.mxu0 %v530
    %570 = vmatprep.subr.mxu0 0.0
    %571 = vmatpush1.msra.mxu0 %v529
    %572 = vmatprep.subr.mxu0 0.0
    %573 = vmatpush1.msra.mxu0 %v528
    %574 = vmatprep.subr.mxu0 0.0
    %575 = vmatpush1.msra.mxu0 %v527
    %576 = vmatprep.subr.mxu0 0.0
    %577 = vmatpush1.msra.mxu0 %v526
    %578 = vmatprep.subr.mxu0 0.0
    %579 = vmatpush2.msra.mxu0 0.0
    %580 = vmatprep.subr.mxu0 0.0
    %581 = vmatpush2.msra.mxu0 0.0
    %582 = vmatprep.subr.mxu0 0.0
    %583 = vmatpush2.msra.mxu0 0.0
    %584 = vmatprep.subr.mxu0 0.0
    %585 = vmatpush2.msra.mxu0 0.0
    %586 = vmatprep.subr.mxu0 0.0
    %587 = vmatpush2.msra.mxu0 0.0
    %588 = vmatprep.subr.mxu0 0.0
    %589 = vmatpush2.msra.mxu0 0.0
    %590 = vmatprep.subr.mxu0 0.0
    %591 = vmatpush2.msra.mxu0 0.0
    %592 = vmatprep.subr.mxu0 0.0
    %593 = vmatpush2.msra.mxu0 0.0
    %594 = vmatprep.subr.mxu0 0.0
    %595 = vmatpush2.msra.mxu0 0.0
    %596 = vmatprep.subr.mxu0 0.0
    %597 = vmatpush2.msra.mxu0 0.0
    %598 = vmatprep.subr.mxu0 0.0
    %599 = vmatpush2.msra.mxu0 0.0
    %600 = vmatprep.subr.mxu0 0.0
    %601 = vmatpush2.msra.mxu0 0.0
    %602 = vmatprep.subr.mxu0 0.0
    %603 = vmatpush2.msra.mxu0 0.0
    %604 = vmatprep.subr.mxu0 0.0
    %605 = vmatpush2.msra.mxu0 0.0
    %606 = vmatprep.subr.mxu0 0.0
    %607 = vmatpush2.msra.mxu0 0.0
    %608 = vmatprep.subr.mxu0 0.0
    %609 = vmatpush2.msra.mxu0 0.0
    %610 = vmatprep.mubr.f32.mxu0 0.0
    %611 = vmatmul.mubr.f32.gmra.mxu0 %v544
    %v612 = vpop.f32.mrf.mxu0
    %v613 = vadd.f32 0.0, %v612
    %v614 = vpop.f32.mrf.mxu0
    %615 = vdwg.mxu0
    %v616 = vadd.f32 %v522, %v613
    %v617 = vld [vmem:[%s4] sm:$0x1]
    %v619 = vlaneseq
    %v620 = vshrl.u32 %v619, 7
    %v621 = vsub.s32 0, %v620
    %v622 = vrot.slane %v617, %v621
    %v624 = vadd.f32 %v616, %v622
    %v625 = vmax.f32 %v624, 0.0
    %626 = vst [vmem:[#allocation8] sm:$0xff] %v625
    // Predicated region
    $region34: #{tpu_custom_call.1} parent=1 // pred_check
      _
    $region35: #{tpu_custom_call.1} parent=1 // pred_check_branch
      %628 = sbr.rel (0) target = $region37
    $region36: #{tpu_custom_call.1} parent=1 // pred_region
      %s630 = ssub.s32 128, 128
      %631 = vsyncadd [#allocation4], %s630
      %s633 = sshll.u32 [#allocation8], 4
      %s634 = int_to_ptr.vmem [resolvable:$true] %s633
      %636 = dma.vmem_to_hbm [thread:$0]  %s634, 128, %s5, [#allocation4]
    $region37: #{tpu_custom_call.1} parent=1 // pred_fallthru
      _
    // Predicated region
    $region38: #{tpu_custom_call.1} parent=1 // pred_check
      _
    $region39: #{tpu_custom_call.1} parent=1 // pred_check_branch
      %638 = sbr.rel (0) target = $region41
    $region40: #{tpu_custom_call.1} parent=1 // pred_region
      %639 = dma.done [#allocation4], 128
    $region41: #{tpu_custom_call.1} parent=1 // pred_fallthru
      _
    %640 = vsyncpa [#allocation3], 1
    %641 = vsyncpa [#allocation6], 1
    %642 = vsyncpa [#allocation4], 1

</llo_original>
